<compile_context>
chip_gen: v7x
topology: tpu7x:2x2x1
jax: 0.10.0
libtpu: 0.0.40
codegen_flags: <defaults>
</compile_context>

<pallas_src>
import jax
import jax.numpy as jnp
from jax.experimental import pallas as pl
from jax.experimental.pallas import tpu as pltpu


def _pick_tile(dim: int, pref: int, align: int) -> int:
    """Largest `align`-multiple divisor of `dim` that is <= pref.

    Falls back to the full dim (always legal for a BlockSpec) when the dim is
    small or has no aligned divisor within `pref`.
    """
    if dim <= pref:
        return dim
    t = (min(pref, dim) // align) * align
    while t >= align:
        if dim % t == 0:
            return t
        t -= align
    return dim


def _sublane_align(dtype) -> int:
    """Sublane alignment for a block's second-minor dim (dtype packing aware)."""
    return max(8, 32 // jnp.dtype(dtype).itemsize)


def _vmem_budget():
    """Returns (per-tile input budget bytes, vmem_limit_bytes, maybe_multicore)."""
    cap = None
    try:
        info = pltpu.get_tpu_info()
        cap = getattr(info, "vmem_capacity_bytes", None)
        cap = int(cap) if cap else None
    except Exception:
        cap = None
    if cap is None:
        # Unknown part: conservative defaults that fit every generation.
        return 8 << 20, 64 << 20, False
    if cap >= (100 << 20):
        # v5e / v6e class: 128 MiB physical VMEM.
        return 16 << 20, 96 << 20, False
    # v7x class: 64 MiB physical VMEM, 2 TensorCores per chip.
    return 16 << 20, 48 << 20, True


def _make_kernel_inline(inv_s: float):
    """f32 output: accumulate directly into the VMEM-resident output block."""

    def kernel(token_ref, out_ref):
        s_idx = pl.program_id(2)

        @pl.when(s_idx == 0)
        def _():
            out_ref[...] = jnp.zeros_like(out_ref)

        out_ref[...] += jnp.sum(token_ref[...], axis=1, dtype=jnp.float32)

        @pl.when(s_idx == pl.num_programs(2) - 1)
        def _():
            out_ref[...] = out_ref[...] * inv_s

    return kernel


def _make_kernel_scratch(inv_s: float):
    """Narrow output dtypes: f32 scratch accumulator, cast only in the epilogue."""

    def kernel(token_ref, out_ref, acc_ref):
        s_idx = pl.program_id(2)

        @pl.when(s_idx == 0)
        def _():
            acc_ref[...] = jnp.zeros_like(acc_ref)

        acc_ref[...] += jnp.sum(token_ref[...], axis=1, dtype=jnp.float32)

        @pl.when(s_idx == pl.num_programs(2) - 1)
        def _():
            out_ref[...] = (acc_ref[...] * inv_s).astype(out_ref.dtype)

    return kernel


def mean_agg(token, *, tb=None, ts=None, th=None):
    """Pallas equivalent of MEAN_AGG.forward: mean over axis 1 of (B, S, H)."""
    B, S, H = token.shape
    dtype = jnp.dtype(token.dtype)
    itemsize = dtype.itemsize
    align_s = _sublane_align(dtype)   # input block (TB, TS, TH): TS is second-minor
    align_b = _sublane_align(dtype)   # output block (TB, TH):    TB is second-minor

    tile_budget, vmem_limit, maybe_multicore = _vmem_budget()

    # --- batch tile: keep it small; the B grid axis provides parallelism. ---
    TB = _pick_tile(B, tb if tb is not None else align_b, align_b)

    # --- hidden tile: prefer full H (contiguous DMA rows, lane-dense store). ---
    min_ts = min(S, align_s)
    if th is not None:
        TH = _pick_tile(H, th, 128)
    elif TB * min_ts * H * itemsize <= tile_budget:
        TH = H
    else:
        th_budget = max(128, tile_budget // (TB * min_ts * itemsize))
        TH = _pick_tile(H, th_budget, 128)

    # --- v7x: guarantee >= 2 parallel tiles so both TensorCores get work. ---
    if (maybe_multicore and tb is None and th is None
            and (B // TB) * (H // TH) < 2):
        cand_h = _pick_tile(H, H // 2, 128) if H >= 2 * 128 else H
        if cand_h < H:
            TH = cand_h
        else:
            cand_b = _pick_tile(B, B // 2, align_b) if B >= 2 * align_b else B
            if cand_b < B:
                TB = cand_b

    # --- seq (reduction) tile: fill the remaining per-tile budget. ---
    ts_budget = max(align_s, tile_budget // max(1, TB * TH * itemsize))
    TS = _pick_tile(S, ts if ts is not None else ts_budget, align_s)

    grid = (B // TB, H // TH, S // TS)
    inv_s = 1.0 / float(S)

    use_scratch = dtype != jnp.dtype(jnp.float32)
    kernel = (_make_kernel_scratch if use_scratch else _make_kernel_inline)(inv_s)
    scratch_shapes = [pltpu.VMEM((TB, TH), jnp.float32)] if use_scratch else []

    # Triple-buffer the input only when the DMA is strided (TH < H) and the
    # extra buffer still fits comfortably under the VMEM limit.
    tile_bytes = TB * TS * TH * itemsize
    resident_bytes = 2 * TB * TH * itemsize + (4 * TB * TH if use_scratch else 0)
    use_buf3 = (TH < H) and (3 * tile_bytes + resident_bytes <= int(0.85 * vmem_limit))
    if use_buf3:
        in_spec = pl.BlockSpec((TB, TS, TH), lambda b, h, s: (b, s, h),
                               pipeline_mode=pl.Buffered(3))
    else:
        in_spec = pl.BlockSpec((TB, TS, TH), lambda b, h, s: (b, s, h))

    cost = pl.CostEstimate(
        flops=B * S * H,                     # one add per input element
        transcendentals=0,
        bytes_accessed=B * S * H * itemsize + B * H * itemsize,
    )

    return pl.pallas_call(
        kernel,
        out_shape=jax.ShapeDtypeStruct((B, H), token.dtype),
        grid_spec=pltpu.PrefetchScalarGridSpec(
            num_scalar_prefetch=0,
            grid=grid,
            in_specs=[in_spec],
            out_specs=pl.BlockSpec((TB, TH), lambda b, h, s: (b, h)),
            scratch_shapes=scratch_shapes,
        ),
        compiler_params=pltpu.CompilerParams(
            dimension_semantics=("parallel", "parallel", "arbitrary"),
            vmem_limit_bytes=vmem_limit,
        ),
        cost_estimate=cost,
    )(token)


if __name__ == "__main__":
    key = jax.random.PRNGKey(0)

    # Small (batch, seq, hidden) input matching the module's forward.
    B, S, H = 2, 8, 32
    token = jax.random.normal(key, (B, S, H), dtype=jnp.float32)
    out = jax.block_until_ready(mean_agg(token))
    ref = jnp.mean(token, axis=1)
    assert out.shape == (B, H)
    assert jnp.allclose(out, ref, atol=1e-5), "mismatch vs reference (small)"

    # Forced small tiles: multi-step reduction, multiple H tiles and a strided
    # (TH < H) input DMA, so the accumulator loop + Buffered(3) path runs.
    token2 = jax.random.normal(jax.random.PRNGKey(0), (4, 64, 256), dtype=jnp.float32)
    out2 = jax.block_until_ready(mean_agg(token2, ts=16, th=128))
    ref2 = jnp.mean(token2, axis=1)
    assert out2.shape == (4, 256)
    assert jnp.allclose(out2, ref2, atol=1e-5), "mismatch vs reference (tiled f32)"

    # bf16 input: exercises the f32 scratch-accumulator path and 16-sublane
    # alignment of the reduction tile.
    token3 = jax.random.normal(jax.random.PRNGKey(0), (4, 64, 256),
                               dtype=jnp.float32).astype(jnp.bfloat16)
    out3 = jax.block_until_ready(mean_agg(token3, ts=16))
    ref3 = jnp.mean(token3.astype(jnp.float32), axis=1)
    assert out3.dtype == jnp.bfloat16
    assert jnp.allclose(out3.astype(jnp.float32), ref3, atol=2e-2), \
        "mismatch vs reference (bf16)"

    print("KERNEL_OK")
</pallas_src>

<mosaic_0001>
module attributes {stable_mosaic.version = 11 : i64} {
  func.func @kernel(%arg0: i32, %arg1: i32, %arg2: i32, %arg3: memref<2x8x32xf32, #tpu.memory_space<vmem>>, %arg4: memref<2x32xf32, #tpu.memory_space<vmem>>) attributes {dimension_semantics = [#tpu.dimension_semantics<parallel>, #tpu.dimension_semantics<parallel>, #tpu.dimension_semantics<arbitrary>], iteration_bounds = array<i64: 1, 1, 1>, scalar_prefetch = 0 : i64, scratch_operands = 0 : i64, tpu.core_type = #tpu.core_type<tc>, window_params = [{transform_indices = @transform_0, window_bounds = array<i64: 2, 8, 32>}, {transform_indices = @transform_1, window_bounds = array<i64: 2, 32>}]} {
    %c0_i32 = arith.constant 0 : i32
    %0 = arith.cmpi eq, %arg2, %c0_i32 : i32
    %1 = arith.extui %0 : i1 to i32
    %c0_i32_0 = arith.constant 0 : i32
    %2 = arith.cmpi ne, %1, %c0_i32_0 : i32
    scf.if %2 {
      %cst_9 = arith.constant 0.000000e+00 : f32
      %11 = vector.broadcast %cst_9 : f32 to vector<2x32xf32>
      %c0_10 = arith.constant 0 : index
      %c0_11 = arith.constant 0 : index
      %12 = vector.load %arg4[%c0_10, %c0_11] : memref<2x32xf32, #tpu.memory_space<vmem>>, vector<2x32xf32>
      tpu.vector_store %arg4[%c0_10, %c0_11], %11 {strides = array<i32>} : memref<2x32xf32, #tpu.memory_space<vmem>>, vector<2x32xf32>,
    } else {
    }
    %c0 = arith.constant 0 : index
    %c0_1 = arith.constant 0 : index
    %3 = vector.load %arg4[%c0, %c0_1] : memref<2x32xf32, #tpu.memory_space<vmem>>, vector<2x32xf32>
    %c0_2 = arith.constant 0 : index
    %c0_3 = arith.constant 0 : index
    %c0_4 = arith.constant 0 : index
    %4 = vector.load %arg3[%c0_2, %c0_3, %c0_4] : memref<2x8x32xf32, #tpu.memory_space<vmem>>, vector<2x8x32xf32>
    %cst = arith.constant dense<0.000000e+00> : vector<2x32xf32>
    %5 = vector.multi_reduction <add>, %4, %cst [1] : vector<2x8x32xf32> to vector<2x32xf32>
    %6 = arith.addf %3, %5 : vector<2x32xf32>
    %c0_5 = arith.constant 0 : index
    %c0_6 = arith.constant 0 : index
    %7 = vector.load %arg4[%c0_5, %c0_6] : memref<2x32xf32, #tpu.memory_space<vmem>>, vector<2x32xf32>
    tpu.vector_store %arg4[%c0_5, %c0_6], %6 {strides = array<i32>} : memref<2x32xf32, #tpu.memory_space<vmem>>, vector<2x32xf32>,
    %c0_i32_7 = arith.constant 0 : i32
    %8 = arith.cmpi eq, %arg2, %c0_i32_7 : i32
    %9 = arith.extui %8 : i1 to i32
    %c0_i32_8 = arith.constant 0 : i32
    %10 = arith.cmpi ne, %9, %c0_i32_8 : i32
    scf.if %10 {
      %c0_9 = arith.constant 0 : index
      %c0_10 = arith.constant 0 : index
      %11 = vector.load %arg4[%c0_9, %c0_10] : memref<2x32xf32, #tpu.memory_space<vmem>>, vector<2x32xf32>
      %cst_11 = arith.constant 1.250000e-01 : f32
      %12 = vector.broadcast %cst_11 : f32 to vector<2x32xf32>
      %13 = arith.mulf %11, %12 : vector<2x32xf32>
      %c0_12 = arith.constant 0 : index
      %c0_13 = arith.constant 0 : index
      %14 = vector.load %arg4[%c0_12, %c0_13] : memref<2x32xf32, #tpu.memory_space<vmem>>, vector<2x32xf32>
      tpu.vector_store %arg4[%c0_12, %c0_13], %13 {strides = array<i32>} : memref<2x32xf32, #tpu.memory_space<vmem>>, vector<2x32xf32>,
    } else {
    }
    return
  }
  func.func @transform_0(%arg0: i32, %arg1: i32, %arg2: i32) -> (i32, i32, i32) {
    %c0_i32 = arith.constant 0 : i32
    return %arg0, %arg2, %arg1 : i32, i32, i32
  }
  func.func @transform_1(%arg0: i32, %arg1: i32, %arg2: i32) -> (i32, i32) {
    %c0_i32 = arith.constant 0 : i32
    return %arg0, %arg1 : i32, i32
  }
}

</mosaic_0001>

<llo_original>
// kernel: tpu_custom_call.1
$region0: #{tpu_custom_call.1}
  #allocation0 [shape = 'u32[]', space=smem, size = 0x4, offset = 0x4, fixed_abs, tag = 'smem constant byte address 0x4 - core index']
  #allocation1 [shape = 'u32[144,128]{1,0:T(1,128)}', space=vmem, size = 0x12000, scoped, tag = 'internal scratch']
  %s0 = inlined_call_operand.hbm [shape: f32[2,8,32], index: 0, kind: input, shape index: {}]
  %s1 = inlined_call_operand.hbm [shape: f32[2,32], index: 1, kind: output, shape index: {}]
  %s2 = sld [smem:[#allocation0]]
  $region26: #{tpu_custom_call.1} parent=0
    _
  %s4 = ssub.s32 1, %s2
  %s5 = scalar_select 0, %s4, %s2
  $region1: #{tpu_custom_call.1} parent=0
    #allocation2 [shape = 'u8[8192]{0}', space=vmem, size = 0x2000, scoped, tag = 'input window, operand 0, single buffered']
    #allocation3 [shape = 's32[1]{0}', space=sflag, size = 0x4, scoped, tag = 'scoped memory for tpu_custom_call.1']
    #allocation4 [shape = 's32[1]{0}', space=sflag, size = 0x4, scoped, tag = 'scoped memory for tpu_custom_call.1']
    #allocation5 [shape = 'u8[1024]{0}', space=vmem, size = 0x400, scoped, tag = 'output window, operand 0, single buffered']
    %6 = vsyncpa [#allocation3], 0
    %7 = vsyncpa [#allocation4], 0
    // Predicated region
    $region2: #{tpu_custom_call.1} parent=1 // pred_check
      _
    $region3: #{tpu_custom_call.1} parent=1 // pred_check_branch
      %9 = sbr.rel (0) target = $region5
    $region4: #{tpu_custom_call.1} parent=1 // pred_region
      %s11 = ssub.s32 256, 256
      %12 = vsyncadd [#allocation3], %s11
      %s13 = sshll.u32 [#allocation2], 4
      %s14 = int_to_ptr.vmem [resolvable:$true] %s13
      %19 = dma.hbm_to_vmem [thread:$0]  %s0, 256, %s14, [#allocation3], 128, 128, 8
    $region5: #{tpu_custom_call.1} parent=1 // pred_fallthru
      _
    // Predicated region
    $region6: #{tpu_custom_call.1} parent=1 // pred_check
      _
    $region7: #{tpu_custom_call.1} parent=1 // pred_check_branch
      %21 = sbr.rel (0) target = $region9
    $region8: #{tpu_custom_call.1} parent=1 // pred_region
      %22 = dma.done [#allocation3], 256
    $region9: #{tpu_custom_call.1} parent=1 // pred_fallthru
      _
    %p23 = scmp.eq.s32.totalorder 0, 0
    // Predicated region
    $region10: #{tpu_custom_call.1} parent=1 // pred_check
      %p24 = pneg %p23
    $region11: #{tpu_custom_call.1} parent=1 // pred_check_branch
      %26 = sbr.rel (%p24) target = $region13
    $region12: #{tpu_custom_call.1} parent=1 // pred_region
      %vm27 = vcmask 254976
      %28 = vst.msk [vmem:[#allocation5] sm:$0x3] %vm27, 0.0
    $region13: #{tpu_custom_call.1} parent=1 // pred_fallthru
      _
    %v29 = vld [vmem:[#allocation5] sm:$0x3]
    %v30 = vld [vmem:[#allocation2] sm:$0xff]
    %v31 = vld [vmem:[#allocation2 + $0x8] sm:$0xff]
    %vm32 = vcmask 261120
    %v33 = vsel %vm32, %v30, 0.0
    %v34 = vrot.slane %v33, 4
    %v35 = vadd.f32 %v33, %v34
    %v36 = vrot.slane %v35, 2
    %v37 = vadd.f32 %v35, %v36
    %v38 = vrot.slane %v37, 1
    %v39 = vadd.f32 %v37, %v38
    %v40 = vsel %vm32, %v31, 0.0
    %v41 = vrot.slane %v40, 4
    %v42 = vadd.f32 %v40, %v41
    %v43 = vrot.slane %v42, 2
    %v44 = vadd.f32 %v42, %v43
    %v45 = vrot.slane %v44, 1
    %v46 = vadd.f32 %v44, %v45
    %vm49 = vcmask 1041409
    %v50 = vsel %vm49, %v46, %v39
    %v52 = vadd.f32 %v29, %v50
    %vm53 = vcmask 254976
    %54 = vst.msk [vmem:[#allocation5] sm:$0x3] %vm53, %v52
    // Predicated region
    $region14: #{tpu_custom_call.1} parent=1 // pred_check
      %p55 = pneg %p23
    $region15: #{tpu_custom_call.1} parent=1 // pred_check_branch
      %57 = sbr.rel (%p55) target = $region17
    $region16: #{tpu_custom_call.1} parent=1 // pred_region
      %v58 = vld [vmem:[#allocation5] sm:$0x3]
      %v59 = vmul.f32 %v58, 0.125
      %60 = vst.msk [vmem:[#allocation5] sm:$0x3] %vm53, %v59
    $region17: #{tpu_custom_call.1} parent=1 // pred_fallthru
      _
    // Predicated region
    $region18: #{tpu_custom_call.1} parent=1 // pred_check
      _
    $region19: #{tpu_custom_call.1} parent=1 // pred_check_branch
      %62 = sbr.rel (0) target = $region21
    $region20: #{tpu_custom_call.1} parent=1 // pred_region
      %s64 = ssub.s32 32, 32
      %65 = vsyncadd [#allocation4], %s64
      %s67 = sshll.u32 [#allocation5], 4
      %s68 = int_to_ptr.vmem [resolvable:$true] %s67
      %70 = dma.vmem_to_hbm [thread:$0]  %s68, 32, %s1, [#allocation4]
    $region21: #{tpu_custom_call.1} parent=1 // pred_fallthru
      _
    // Predicated region
    $region22: #{tpu_custom_call.1} parent=1 // pred_check
      _
    $region23: #{tpu_custom_call.1} parent=1 // pred_check_branch
      %72 = sbr.rel (0) target = $region25
    $region24: #{tpu_custom_call.1} parent=1 // pred_region
      %73 = dma.done [#allocation4], 32
    $region25: #{tpu_custom_call.1} parent=1 // pred_fallthru
      _
    %74 = vsyncpa [#allocation3], 1
    %75 = vsyncpa [#allocation4], 1

</llo_original>
